<compile_context>
chip_gen: v7x
topology: tpu7x:2x2x1
jax: 0.10.0
libtpu: 0.0.40
codegen_flags: <defaults>
</compile_context>

<pallas_src>
import jax
import jax.numpy as jnp
from jax.experimental import pallas as pl
from jax.experimental.pallas import tpu as pltpu

REDUCED_DIM = 8       # input channels
HIDDEN_DIM = 4        # conv_1 out channels == deconv_1 in channels (expand_dim)
OUT_DIM = 4           # deconv_1 out channels
LEAKY_SLOPE = 0.01    # F.leaky_relu default negative_slope

LANE = 128
MAX_PIXELS_PER_STEP = 64 * 1024   # (Nb * tile) cap: ~8 MiB double-buffered VMEM
MAX_IMAGES_PER_STEP = 8           # bound on the unrolled per-image loop


def _make_kernel(nb):
    """Fused 1x1 conv -> leaky_relu -> 1x1 conv-transpose -> leaky_relu -> sigmoid.

    Lane-dense layout, nb images per grid step:
      x_ref  : [nb, Cin,  T]
      w1_ref : [Chid, Cin]   conv_1 weight (1x1 kernel squeezed)
      b1_ref : [Chid, 1]
      w2t_ref: [Cout, Chid]  deconv_1 weight, pre-transposed ([in,out] -> [out,in])
      b2_ref : [Cout, 1]
      o_ref  : [nb, Cout, T]
    """
    def kernel(x_ref, w1_ref, b1_ref, w2t_ref, b2_ref, o_ref):
        w1 = w1_ref[...]
        b1 = b1_ref[...]
        w2t = w2t_ref[...]
        b2 = b2_ref[...]
        for b in range(nb):                       # small static unroll
            x = x_ref[b]                          # [Cin, T]
            h = jnp.dot(w1, x, preferred_element_type=jnp.float32) + b1
            h = jnp.maximum(h, LEAKY_SLOPE * h)   # leaky_relu (slope < 1)
            y = jnp.dot(w2t, h, preferred_element_type=jnp.float32) + b2
            y = jnp.maximum(y, LEAKY_SLOPE * y)
            # sigmoid; elementwise, so applying it before the spatial crop
            # (done in the wrapper) matches PyTorch's crop-then-sigmoid.
            sig = pl.reciprocal(1.0 + jnp.exp(-y), approx=True)
            o_ref[b] = sig.astype(o_ref.dtype)
    return kernel


def _choose_blocking(n, hw):
    """Pick (images-per-step, pixel-tile) for the grid."""
    if hw >= MAX_PIXELS_PER_STEP:
        tile = MAX_PIXELS_PER_STEP            # multiple of 128; trailing block is masked
        nb = 1
    else:
        tile = hw                             # full pixel axis per step (no raggedness)
        padded = pl.cdiv(hw, LANE) * LANE     # lane-padded footprint in VMEM
        nb = max(1, min(MAX_PIXELS_PER_STEP // padded, MAX_IMAGES_PER_STEP, n))
    # Prefer >= 2 grid steps so the v7x megacore partitioner has work to split.
    if pl.cdiv(n, nb) * pl.cdiv(hw, tile) < 2 and nb > 1:
        nb = pl.cdiv(nb, 2)
    return nb, tile


def conv_autoencoder_forward(x_nchw, w1, b1, w2, b2):
    """Forward pass matching ConvolutionalAutoencoder.forward.

    x_nchw: [N, REDUCED_DIM, H, W] float32
    w1: [HIDDEN_DIM, REDUCED_DIM]   (Conv2d weight squeezed over 1x1 kernel)
    b1: [HIDDEN_DIM]
    w2: [HIDDEN_DIM, OUT_DIM]       (ConvTranspose2d weight squeezed over 1x1)
    b2: [OUT_DIM]
    returns: [N, OUT_DIM, H-1, W-1] float32
    """
    N, C, H, W = x_nchw.shape
    assert C == REDUCED_DIM
    HW = H * W

    # NCHW already has pixels contiguous on the last axis: free reshape, no pad.
    x_flat = x_nchw.reshape(N, C, HW)

    nb, tile = _choose_blocking(N, HW)
    grid = (pl.cdiv(N, nb), pl.cdiv(HW, tile))

    w2t = w2.T                                   # [Cout, Chid]
    b1c = b1.reshape(HIDDEN_DIM, 1)
    b2c = b2.reshape(OUT_DIM, 1)

    pixels = N * HW
    cost = pl.CostEstimate(
        flops=pixels * (2 * C * HIDDEN_DIM + 2 * HIDDEN_DIM * OUT_DIM),
        transcendentals=pixels * OUT_DIM,                # exp in sigmoid
        bytes_accessed=pixels * (C + OUT_DIM) * 4,       # HBM-bandwidth bound
    )

    out_flat = pl.pallas_call(
        _make_kernel(nb),
        out_shape=jax.ShapeDtypeStruct((N, OUT_DIM, HW), jnp.float32),
        grid_spec=pltpu.PrefetchScalarGridSpec(
            num_scalar_prefetch=0,
            grid=grid,
            in_specs=[
                pl.BlockSpec((nb, C, tile), lambda n, j: (n, 0, j)),
                pl.BlockSpec((HIDDEN_DIM, C), lambda n, j: (0, 0)),
                pl.BlockSpec((HIDDEN_DIM, 1), lambda n, j: (0, 0)),
                pl.BlockSpec((OUT_DIM, HIDDEN_DIM), lambda n, j: (0, 0)),
                pl.BlockSpec((OUT_DIM, 1), lambda n, j: (0, 0)),
            ],
            out_specs=pl.BlockSpec((nb, OUT_DIM, tile), lambda n, j: (n, 0, j)),
        ),
        compiler_params=pltpu.CompilerParams(
            dimension_semantics=("parallel", "parallel"),
            vmem_limit_bytes=32 * 1024 * 1024),
        cost_estimate=cost,
    )(x_flat, w1, b1c, w2t, b2c)

    # Free reshape, then the crop (left in the wrapper per the perf review:
    # fusing it would require masked width-(W-1) stores).
    out = out_flat.reshape(N, OUT_DIM, H, W)
    return out[:, :, :-1, :-1]


def _reference(x_nchw, w1, b1, w2, b2):
    """Pure-JAX reference of the PyTorch forward (for verification)."""
    x = jnp.einsum("nchw,oc->nohw", x_nchw, w1) + b1[None, :, None, None]
    x = jnp.where(x > 0, x, LEAKY_SLOPE * x)
    x = jnp.einsum("nchw,co->nohw", x, w2) + b2[None, :, None, None]
    x = jnp.where(x > 0, x, LEAKY_SLOPE * x)
    x = x[:, :, :-1, :-1]
    return jax.nn.sigmoid(x)


def _check(out, ref, expected_shape, name):
    assert out.shape == expected_shape, (name, out.shape, expected_shape)
    err = float(jnp.max(jnp.abs(out - ref)))
    # Tolerance loosened vs pure-f32 because sigmoid uses the EUP approx
    # reciprocal path (per the perf review).
    assert err < 1e-2, f"{name}: max abs err {err}"


if __name__ == "__main__":
    key = jax.random.PRNGKey(0)
    kx, k1, k2, k3, k4, kx2, kx3, kx4 = jax.random.split(key, 8)

    # Deterministic synthetic weights.
    w1 = 0.2 * jax.random.normal(k1, (HIDDEN_DIM, REDUCED_DIM), dtype=jnp.float32)
    b1 = 0.1 * jax.random.normal(k2, (HIDDEN_DIM,), dtype=jnp.float32)
    w2 = 0.2 * jax.random.normal(k3, (HIDDEN_DIM, OUT_DIM), dtype=jnp.float32)
    b2 = 0.1 * jax.random.normal(k4, (OUT_DIM,), dtype=jnp.float32)

    # Case 1: small canonical shape (batch=2, 16x16).
    N, H, W = 2, 16, 16
    x = jax.random.normal(kx, (N, REDUCED_DIM, H, W), dtype=jnp.float32)
    out = jax.block_until_ready(conv_autoencoder_forward(x, w1, b1, w2, b2))
    ref = jax.block_until_ready(_reference(x, w1, b1, w2, b2))
    _check(out, ref, (N, OUT_DIM, H - 1, W - 1), "case1")

    # Case 2: spatial size not a multiple of 128 pixels (full-extent pixel block).
    H2, W2 = 15, 15
    x2 = jax.random.normal(kx2, (N, REDUCED_DIM, H2, W2), dtype=jnp.float32)
    out2 = jax.block_until_ready(conv_autoencoder_forward(x2, w1, b1, w2, b2))
    ref2 = jax.block_until_ready(_reference(x2, w1, b1, w2, b2))
    _check(out2, ref2, (N, OUT_DIM, H2 - 1, W2 - 1), "case2")

    # Case 3: odd batch -> multi-image blocks with a ragged trailing batch block
    # (exercises Pallas edge-block masking with no wrapper pad/slice).
    N3, H3, W3 = 3, 20, 20
    x3 = jax.random.normal(kx3, (N3, REDUCED_DIM, H3, W3), dtype=jnp.float32)
    out3 = jax.block_until_ready(conv_autoencoder_forward(x3, w1, b1, w2, b2))
    ref3 = jax.block_until_ready(_reference(x3, w1, b1, w2, b2))
    _check(out3, ref3, (N3, OUT_DIM, H3 - 1, W3 - 1), "case3")

    # Case 4: large image -> 64K-pixel tiles with a ragged trailing pixel block.
    N4, H4, W4 = 1, 272, 272
    x4 = jax.random.normal(kx4, (N4, REDUCED_DIM, H4, W4), dtype=jnp.float32)
    out4 = jax.block_until_ready(conv_autoencoder_forward(x4, w1, b1, w2, b2))
    ref4 = jax.block_until_ready(_reference(x4, w1, b1, w2, b2))
    _check(out4, ref4, (N4, OUT_DIM, H4 - 1, W4 - 1), "case4")

    print("KERNEL_OK")
</pallas_src>

<mosaic_0001>
module attributes {stable_mosaic.version = 11 : i64} {
  func.func @kernel(%arg0: i32, %arg1: i32, %arg2: memref<1x8x256xf32, #tpu.memory_space<vmem>>, %arg3: memref<4x8xf32, #tpu.memory_space<vmem>>, %arg4: memref<4x1xf32, #tpu.memory_space<vmem>>, %arg5: memref<4x4xf32, #tpu.memory_space<vmem>>, %arg6: memref<4x1xf32, #tpu.memory_space<vmem>>, %arg7: memref<1x4x256xf32, #tpu.memory_space<vmem>>) attributes {dimension_semantics = [#tpu.dimension_semantics<parallel>, #tpu.dimension_semantics<parallel>], iteration_bounds = array<i64: 2, 1>, scalar_prefetch = 0 : i64, scratch_operands = 0 : i64, tpu.core_type = #tpu.core_type<tc>, window_params = [{transform_indices = @transform_0, window_bounds = array<i64: 1, 8, 256>}, {pipeline_mode = #tpu.pipeline_mode<synchronous>, transform_indices = @transform_1, window_bounds = array<i64: 4, 8>}, {pipeline_mode = #tpu.pipeline_mode<synchronous>, transform_indices = @transform_2, window_bounds = array<i64: 4, 1>}, {pipeline_mode = #tpu.pipeline_mode<synchronous>, transform_indices = @transform_3, window_bounds = array<i64: 4, 4>}, {pipeline_mode = #tpu.pipeline_mode<synchronous>, transform_indices = @transform_4, window_bounds = array<i64: 4, 1>}, {transform_indices = @transform_5, window_bounds = array<i64: 1, 4, 256>}]} {
    %c0 = arith.constant 0 : index
    %c0_0 = arith.constant 0 : index
    %0 = vector.load %arg3[%c0, %c0_0] : memref<4x8xf32, #tpu.memory_space<vmem>>, vector<4x8xf32>
    %c0_1 = arith.constant 0 : index
    %c0_2 = arith.constant 0 : index
    %1 = vector.load %arg4[%c0_1, %c0_2] : memref<4x1xf32, #tpu.memory_space<vmem>>, vector<4x1xf32>
    %c0_3 = arith.constant 0 : index
    %c0_4 = arith.constant 0 : index
    %2 = vector.load %arg5[%c0_3, %c0_4] : memref<4x4xf32, #tpu.memory_space<vmem>>, vector<4x4xf32>
    %c0_5 = arith.constant 0 : index
    %c0_6 = arith.constant 0 : index
    %3 = vector.load %arg6[%c0_5, %c0_6] : memref<4x1xf32, #tpu.memory_space<vmem>>, vector<4x1xf32>
    %c0_7 = arith.constant 0 : index
    %c0_8 = arith.constant 0 : index
    %c0_9 = arith.constant 0 : index
    %4 = vector.load %arg2[%c0_7, %c0_8, %c0_9] : memref<1x8x256xf32, #tpu.memory_space<vmem>>, vector<1x8x256xf32>
    %5 = vector.shape_cast %4 : vector<1x8x256xf32> to vector<8x256xf32>
    %cst = arith.constant dense<0.000000e+00> : vector<4x256xf32>
    %6 = tpu.matmul %0, %5, %cst {dimension_numbers = #tpu.dot_dimension_numbers<[1], [0], [0], [1], [0, 0, 1, 1], [], []>} : vector<4x8xf32>, vector<8x256xf32>, vector<4x256xf32> -> vector<4x256xf32>
    %7 = vector.broadcast %1 : vector<4x1xf32> to vector<4x256xf32>
    %8 = arith.addf %6, %7 : vector<4x256xf32>
    %cst_10 = arith.constant 0.00999999977 : f32
    %9 = vector.broadcast %cst_10 : f32 to vector<4x256xf32>
    %10 = arith.mulf %9, %8 : vector<4x256xf32>
    %11 = arith.maximumf %8, %10 : vector<4x256xf32>
    %cst_11 = arith.constant dense<0.000000e+00> : vector<4x256xf32>
    %12 = tpu.matmul %2, %11, %cst_11 {dimension_numbers = #tpu.dot_dimension_numbers<[1], [0], [0], [1], [0, 0, 1, 1], [], []>} : vector<4x4xf32>, vector<4x256xf32>, vector<4x256xf32> -> vector<4x256xf32>
    %13 = vector.broadcast %3 : vector<4x1xf32> to vector<4x256xf32>
    %14 = arith.addf %12, %13 : vector<4x256xf32>
    %cst_12 = arith.constant 0.00999999977 : f32
    %15 = vector.broadcast %cst_12 : f32 to vector<4x256xf32>
    %16 = arith.mulf %15, %14 : vector<4x256xf32>
    %17 = arith.maximumf %14, %16 : vector<4x256xf32>
    %cst_13 = arith.constant 0.000000e+00 : f32
    %18 = vector.broadcast %cst_13 : f32 to vector<4x256xf32>
    %19 = arith.subf %18, %17 : vector<4x256xf32>
    %20 = math.exp %19 : vector<4x256xf32>
    %cst_14 = arith.constant 1.000000e+00 : f32
    %21 = vector.broadcast %cst_14 : f32 to vector<4x256xf32>
    %22 = arith.addf %21, %20 : vector<4x256xf32>
    %23 = tpu.reciprocal %22 {approx = true} : vector<4x256xf32> -> vector<4x256xf32>
    %c0_15 = arith.constant 0 : index
    %c0_16 = arith.constant 0 : index
    %c0_17 = arith.constant 0 : index
    %24 = vector.load %arg7[%c0_15, %c0_16, %c0_17] : memref<1x4x256xf32, #tpu.memory_space<vmem>>, vector<1x4x256xf32>
    %25 = vector.shape_cast %24 : vector<1x4x256xf32> to vector<4x256xf32>
    %26 = vector.shape_cast %23 : vector<4x256xf32> to vector<1x4x256xf32>
    tpu.vector_store %arg7[%c0_15, %c0_16, %c0_17], %26 {strides = array<i32>} : memref<1x4x256xf32, #tpu.memory_space<vmem>>, vector<1x4x256xf32>,
    return
  }
  func.func @transform_0(%arg0: i32, %arg1: i32) -> (i32, i32, i32) {
    %c0_i32 = arith.constant 0 : i32
    %c0_i32_0 = arith.constant 0 : i32
    return %arg0, %c0_i32, %arg1 : i32, i32, i32
  }
  func.func @transform_1(%arg0: i32, %arg1: i32) -> (i32, i32) {
    %c0_i32 = arith.constant 0 : i32
    %c0_i32_0 = arith.constant 0 : i32
    %c0_i32_1 = arith.constant 0 : i32
    return %c0_i32, %c0_i32_0 : i32, i32
  }
  func.func @transform_2(%arg0: i32, %arg1: i32) -> (i32, i32) {
    %c0_i32 = arith.constant 0 : i32
    %c0_i32_0 = arith.constant 0 : i32
    %c0_i32_1 = arith.constant 0 : i32
    return %c0_i32, %c0_i32_0 : i32, i32
  }
  func.func @transform_3(%arg0: i32, %arg1: i32) -> (i32, i32) {
    %c0_i32 = arith.constant 0 : i32
    %c0_i32_0 = arith.constant 0 : i32
    %c0_i32_1 = arith.constant 0 : i32
    return %c0_i32, %c0_i32_0 : i32, i32
  }
  func.func @transform_4(%arg0: i32, %arg1: i32) -> (i32, i32) {
    %c0_i32 = arith.constant 0 : i32
    %c0_i32_0 = arith.constant 0 : i32
    %c0_i32_1 = arith.constant 0 : i32
    return %c0_i32, %c0_i32_0 : i32, i32
  }
  func.func @transform_5(%arg0: i32, %arg1: i32) -> (i32, i32, i32) {
    %c0_i32 = arith.constant 0 : i32
    %c0_i32_0 = arith.constant 0 : i32
    return %arg0, %c0_i32, %arg1 : i32, i32, i32
  }
}

</mosaic_0001>

<llo_original>
// kernel: tpu_custom_call.1
$region0: #{tpu_custom_call.1}
  #allocation0 [shape = 'u32[]', space=smem, size = 0x4, offset = 0x4, fixed_abs, tag = 'smem constant byte address 0x4 - core index']
  #allocation1 [shape = 'u32[144,128]{1,0:T(1,128)}', space=vmem, size = 0x12000, scoped, tag = 'internal scratch']
  %s0 = inlined_call_operand.hbm [shape: f32[2,8,256], index: 0, kind: input, shape index: {}]
  %s1 = inlined_call_operand.vmem [shape: f32[4,8], index: 1, kind: input, shape index: {}]
  %s2 = inlined_call_operand.vmem [shape: f32[4,1], index: 2, kind: input, shape index: {}]
  %s3 = inlined_call_operand.vmem [shape: f32[4,4], index: 3, kind: input, shape index: {}]
  %s4 = inlined_call_operand.vmem [shape: f32[4,1], index: 4, kind: input, shape index: {}]
  %s5 = inlined_call_operand.hbm [shape: f32[2,4,256], index: 5, kind: output, shape index: {}]
  %s6 = sld [smem:[#allocation0]]
  $region57: #{tpu_custom_call.1} parent=0
    _
  %s8 = ssub.s32 1, %s6
  %s9 = scalar_select 0, %s8, %s6
  $region1: #{tpu_custom_call.1} parent=0
    #allocation2 [shape = 'u8[16384]{0}', space=vmem, size = 0x4000, scoped, tag = 'input window, operand 0']
    #allocation3 [shape = 's32[2]{0}', space=sflag, size = 0x8, scoped, tag = 'scoped memory for tpu_custom_call.1']
    #allocation4 [shape = 's32[2]{0}', space=sflag, size = 0x8, scoped, tag = 'scoped memory for tpu_custom_call.1']
    #allocation5 [shape = 'u8[8192]{0}', space=vmem, size = 0x2000, scoped, tag = 'output window, operand 0']
    %10 = vsyncpa [#allocation3], 0
    %s11 = scalar_lea.sflag [#allocation3], 1
    %12 = vsyncpa %s11, 0
    %13 = vsyncpa [#allocation4], 0
    %s14 = scalar_lea.sflag [#allocation4], 1
    %15 = vsyncpa %s14, 0
    loop: start=0, step=1, limit=4
    $region2: #{tpu_custom_call.1} parent=1 // loop_pre_header
      _
    $region3: #{tpu_custom_call.1} parent=1 // loop_header
      %s17 = sphi 0, %s21
      %p18 = scmp.ge.s32.totalorder %s17, 4
      %s24 = sphi 0, %s36
      %s25 = sphi 0, %s32
      %s26 = sphi 0, %s24
      %s27 = sphi 0, %s25
      %s28 = sphi 0, %s26
      %s29 = sphi 0, %s27
      %s41 = sphi 0, %s43
      %s44 = sphi 0, %s41
      %s45 = sphi 0, %s44
      %s61 = sphi 0, %s45
      %s65 = sphi 0, %s65
      %s67 = sphi 0, %s65
      %s68 = sphi 0, %s67
      %s82 = sphi 0, %s68
      %s86 = sphi 0, %s86
      %s88 = sphi 0, %s86
      %s89 = sphi 0, %s88
      %s103 = sphi 0, %s89
      %s107 = sphi 0, %s107
      %s109 = sphi 0, %s107
      %s110 = sphi 0, %s109
      %s124 = sphi 0, %s110
      %s128 = sphi 0, %s128
      %s130 = sphi 0, %s128
      %s131 = sphi 0, %s130
      %s145 = sphi 0, %s131
      %s153 = sphi 0, %s155
      %s156 = sphi 0, %s153
      %s157 = sphi 0, %s156
      %s173 = sphi 0, %s157
    $region4: #{tpu_custom_call.1} parent=1 // loop_header_branch
      %20 = sbr.rel (%p18) target = $region8
    $region5: #{tpu_custom_call.1} parent=1 // loop_body
      %s22 = ssub.s32 %s17, 1
      %s23 = ssub.s32 %s17, 2
      %s30 = sadd.s32 1, %s25
      %p31 = scmp.ge.s32.totalorder %s30, 1
      %s32 = scalar_select %p31, 0, %s30
      %s33 = sadd.s32 1, %s24
      %s34 = scalar_select %p31, %s33, %s24
      %p35 = scmp.ge.s32.totalorder %s34, 2
      %s36 = scalar_select %p35, 0, %s34
      %s37 = ssub.s32 %s24, %s36
      %s38 = ssub.s32 %s25, %s32
      %s39 = sor.u32 %s37, %s38
      %p40 = scmp.eq.s32.totalorder %s39, 0
      %s42 = sadd.s32 %s41, 1
      %s43 = scalar_select %p40, %s41, %s42
      %p46 = pneg %p40
      %p47 = scmp.eq.s32.totalorder %s17, 1
      %p48 = por %p46, %p47
      %p49 = scmp.ne.s32.totalorder %s41, %s44
      %p50 = scmp.eq.s32.totalorder %s17, 0
      %p51 = por %p49, %p50
      %p52 = scmp.ne.s32.totalorder %s41, %s44
      %p53 = scmp.eq.s32.totalorder %s22, 1
      %p54 = por %p52, %p53
      %p55 = scmp.ne.s32.totalorder %s44, %s45
      %p56 = scmp.eq.s32.totalorder %s22, 0
      %p57 = por %p55, %p56
      %p58 = scmp.ne.s32.totalorder %s44, %s45
      %p59 = scmp.eq.s32.totalorder %s23, 1
      %p60 = por %p58, %p59
      %p62 = scmp.ne.s32.totalorder %s45, %s61
      %p63 = scmp.eq.s32.totalorder %s23, 0
      %p64 = por %p62, %p63
      %s66 = sadd.s32 %s65, 1
      %p69 = scmp.eq.s32.totalorder %s17, 1
      %p70 = scmp.ne.s32.totalorder %s65, %s67
      %p71 = scmp.eq.s32.totalorder %s17, 0
      %p72 = por %p70, %p71
      %p73 = scmp.ne.s32.totalorder %s65, %s67
      %p74 = scmp.eq.s32.totalorder %s22, 1
      %p75 = por %p73, %p74
      %p76 = scmp.ne.s32.totalorder %s67, %s68
      %p77 = scmp.eq.s32.totalorder %s22, 0
      %p78 = por %p76, %p77
      %p79 = scmp.ne.s32.totalorder %s67, %s68
      %p80 = scmp.eq.s32.totalorder %s23, 1
      %p81 = por %p79, %p80
      %p83 = scmp.ne.s32.totalorder %s68, %s82
      %p84 = scmp.eq.s32.totalorder %s23, 0
      %p85 = por %p83, %p84
      %s87 = sadd.s32 %s86, 1
      %p90 = scmp.eq.s32.totalorder %s17, 1
      %p91 = scmp.ne.s32.totalorder %s86, %s88
      %p92 = scmp.eq.s32.totalorder %s17, 0
      %p93 = por %p91, %p92
      %p94 = scmp.ne.s32.totalorder %s86, %s88
      %p95 = scmp.eq.s32.totalorder %s22, 1
      %p96 = por %p94, %p95
      %p97 = scmp.ne.s32.totalorder %s88, %s89
      %p98 = scmp.eq.s32.totalorder %s22, 0
      %p99 = por %p97, %p98
      %p100 = scmp.ne.s32.totalorder %s88, %s89
      %p101 = scmp.eq.s32.totalorder %s23, 1
      %p102 = por %p100, %p101
      %p104 = scmp.ne.s32.totalorder %s89, %s103
      %p105 = scmp.eq.s32.totalorder %s23, 0
      %p106 = por %p104, %p105
      %s108 = sadd.s32 %s107, 1
      %p111 = scmp.eq.s32.totalorder %s17, 1
      %p112 = scmp.ne.s32.totalorder %s107, %s109
      %p113 = scmp.eq.s32.totalorder %s17, 0
      %p114 = por %p112, %p113
      %p115 = scmp.ne.s32.totalorder %s107, %s109
      %p116 = scmp.eq.s32.totalorder %s22, 1
      %p117 = por %p115, %p116
      %p118 = scmp.ne.s32.totalorder %s109, %s110
      %p119 = scmp.eq.s32.totalorder %s22, 0
      %p120 = por %p118, %p119
      %p121 = scmp.ne.s32.totalorder %s109, %s110
      %p122 = scmp.eq.s32.totalorder %s23, 1
      %p123 = por %p121, %p122
      %p125 = scmp.ne.s32.totalorder %s110, %s124
      %p126 = scmp.eq.s32.totalorder %s23, 0
      %p127 = por %p125, %p126
      %s129 = sadd.s32 %s128, 1
      %p132 = scmp.eq.s32.totalorder %s17, 1
      %p133 = scmp.ne.s32.totalorder %s128, %s130
      %p134 = scmp.eq.s32.totalorder %s17, 0
      %p135 = por %p133, %p134
      %p136 = scmp.ne.s32.totalorder %s128, %s130
      %p137 = scmp.eq.s32.totalorder %s22, 1
      %p138 = por %p136, %p137
      %p139 = scmp.ne.s32.totalorder %s130, %s131
      %p140 = scmp.eq.s32.totalorder %s22, 0
      %p141 = por %p139, %p140
      %p142 = scmp.ne.s32.totalorder %s130, %s131
      %p143 = scmp.eq.s32.totalorder %s23, 1
      %p144 = por %p142, %p143
      %p146 = scmp.ne.s32.totalorder %s131, %s145
      %p147 = scmp.eq.s32.totalorder %s23, 0
      %p148 = por %p146, %p147
      %s149 = ssub.s32 %s24, %s36
      %s150 = ssub.s32 %s25, %s32
      %s151 = sor.u32 %s149, %s150
      %p152 = scmp.eq.s32.totalorder %s151, 0
      %s154 = sadd.s32 %s153, 1
      %s155 = scalar_select %p152, %s153, %s154
      %p158 = pneg %p152
      %p159 = scmp.eq.s32.totalorder %s17, 1
      %p160 = por %p158, %p159
      %p161 = scmp.ne.s32.totalorder %s153, %s156
      %p162 = scmp.eq.s32.totalorder %s17, 0
      %p163 = por %p161, %p162
      %p164 = scmp.ne.s32.totalorder %s153, %s156
      %p165 = scmp.eq.s32.totalorder %s22, 1
      %p166 = por %p164, %p165
      %p167 = scmp.ne.s32.totalorder %s156, %s157
      %p168 = scmp.eq.s32.totalorder %s22, 0
      %p169 = por %p167, %p168
      %p170 = scmp.ne.s32.totalorder %s156, %s157
      %p171 = scmp.eq.s32.totalorder %s23, 1
      %p172 = por %p170, %p171
      %p174 = scmp.ne.s32.totalorder %s157, %s173
      %p175 = scmp.eq.s32.totalorder %s23, 0
      %p176 = por %p174, %p175
      %p177 = scmp.le.s32.totalorder 1, %s17
      %p178 = scmp.lt.s32.totalorder %s17, 3
      %p179 = pnand %p177, %p178
      %p180 = pneg %p179
      // Predicated region
      $region9: #{tpu_custom_call.1} parent=5 // pred_check
        _
      $region10: #{tpu_custom_call.1} parent=5 // pred_check_branch
        %182 = sbr.rel (%p179) target = $region12
      $region11: #{tpu_custom_call.1} parent=5 // pred_region
        %s183 = ssub.s32 %s17, 1
        // Predicated region
        $region13: #{tpu_custom_call.1} parent=11 // pred_check
          %p184 = pneg %p78
        $region14: #{tpu_custom_call.1} parent=11 // pred_check_branch
          %186 = sbr.rel (%p184) target = $region16
        $region15: #{tpu_custom_call.1} parent=11 // pred_region
          _
        $region16: #{tpu_custom_call.1} parent=11 // pred_fallthru
          _
        // Predicated region
        $region17: #{tpu_custom_call.1} parent=11 // pred_check
          %p187 = pneg %p99
        $region18: #{tpu_custom_call.1} parent=11 // pred_check_branch
          %189 = sbr.rel (%p187) target = $region20
        $region19: #{tpu_custom_call.1} parent=11 // pred_region
          _
        $region20: #{tpu_custom_call.1} parent=11 // pred_fallthru
          _
        // Predicated region
        $region21: #{tpu_custom_call.1} parent=11 // pred_check
          %p190 = pneg %p120
        $region22: #{tpu_custom_call.1} parent=11 // pred_check_branch
          %192 = sbr.rel (%p190) target = $region24
        $region23: #{tpu_custom_call.1} parent=11 // pred_region
          _
        $region24: #{tpu_custom_call.1} parent=11 // pred_fallthru
          _
        // Predicated region
        $region25: #{tpu_custom_call.1} parent=11 // pred_check
          %p193 = pneg %p141
        $region26: #{tpu_custom_call.1} parent=11 // pred_check_branch
          %195 = sbr.rel (%p193) target = $region28
        $region27: #{tpu_custom_call.1} parent=11 // pred_region
          _
        $region28: #{tpu_custom_call.1} parent=11 // pred_fallthru
          _
      $region12: #{tpu_custom_call.1} parent=5 // pred_fallthru
        _
      %p196 = scmp.lt.s32.totalorder %s17, 2
      // Predicated region
      $region29: #{tpu_custom_call.1} parent=5 // pred_check
        %p197 = pneg %p196
      $region30: #{tpu_custom_call.1} parent=5 // pred_check_branch
        %199 = sbr.rel (%p197) target = $region32
      $region31: #{tpu_custom_call.1} parent=5 // pred_region
        // Predicated region
        $region33: #{tpu_custom_call.1} parent=31 // pred_check
          %p200 = pneg %p51
        $region34: #{tpu_custom_call.1} parent=31 // pred_check_branch
          %202 = sbr.rel (%p200) target = $region36
        $region35: #{tpu_custom_call.1} parent=31 // pred_region
          %s203 = sand.u32 %s41, 1
          %s204 = scalar_lea.sflag [#allocation3], %s203
          %s205 = sand.u32 %s41, 1
          %s206 = smul.addr %s205, 16
          %s207 = scalar_lea.vmem [#allocation2], %s206
          %s208 = smul.u32 2, %s25
          %s210 = ssub.s32 256, 256
          %211 = vsyncadd %s204, %s210
          %s212 = smul.addr %s24, 2
          %s213 = sadd.s32 %s208, %s212
          %s214 = smul.addr %s213, 128
          %s215 = scalar_lea.hbm %s0, %s214
          %s217 = sshll.u32 %s207, 4
          %s218 = int_to_ptr.vmem [resolvable:$true] %s217
          %220 = dma.hbm_to_vmem [thread:$0]  %s215, 256, %s218, %s204
        $region36: #{tpu_custom_call.1} parent=31 // pred_fallthru
          _
      $region32: #{tpu_custom_call.1} parent=5 // pred_fallthru
        _
      %p221 = scmp.le.s32.totalorder 1, %s17
      %p222 = scmp.lt.s32.totalorder %s17, 3
      %p223 = pnand %p221, %p222
      %p224 = pneg %p223
      // Predicated region
      $region37: #{tpu_custom_call.1} parent=5 // pred_check
        _
      $region38: #{tpu_custom_call.1} parent=5 // pred_check_branch
        %226 = sbr.rel (%p223) target = $region40
      $region39: #{tpu_custom_call.1} parent=5 // pred_region
        %s227 = ssub.s32 %s17, 1
        %s228 = sand.u32 %s44, 1
        %s229 = scalar_lea.sflag [#allocation3], %s228
        %s230 = sand.u32 %s44, 1
        %s231 = smul.addr %s230, 16
        %s232 = scalar_lea.vmem [#allocation2], %s231
        // Predicated region
        $region41: #{tpu_custom_call.1} parent=39 // pred_check
          %p233 = pneg %p57
        $region42: #{tpu_custom_call.1} parent=39 // pred_check_branch
          %235 = sbr.rel (%p233) target = $region44
        $region43: #{tpu_custom_call.1} parent=39 // pred_region
          %236 = dma.done %s229, 256
        $region44: #{tpu_custom_call.1} parent=39 // pred_fallthru
          _
        %s237 = sand.u32 %s44, 1
        %s238 = scalar_lea.sflag [#allocation3], %s237
        %s239 = sand.u32 %s44, 1
        %s240 = smul.addr %s239, 16
        %s241 = scalar_lea.vmem [#allocation2], %s240
        %p242 = pneg %p57
        %p243 = pneg %p54
        %p244 = pneg %p78
        %p245 = pneg %p75
        %p246 = pneg %p99
        %p247 = pneg %p96
        %p248 = pneg %p120
        %p249 = pneg %p117
        %p250 = pneg %p141
        %p251 = pneg %p138
        %p252 = pneg %p169
        %p253 = pneg %p166
        %s254 = sand.u32 %s156, 1
        %s255 = scalar_lea.sflag [#allocation4], %s254
        %s256 = sand.u32 %s156, 1
        %s257 = smul.addr %s256, 8
        %s258 = scalar_lea.vmem [#allocation5], %s257
        %s259 = smul.u32 2, %s27
        %s260 = smul.u32 2, %s27
        %v261 = vld [vmem:[%s1] sm:$0xf]
        %v262 = vld [vmem:[%s2] sm:$0xf]
        %v263 = vld [vmem:[%s3] sm:$0xf]
        %v264 = vld [vmem:[%s4] sm:$0xf]
        %v265 = vld [vmem:[%s232] sm:$0xff]
        %v266 = vld [vmem:[%s232 + $0x8] sm:$0xff]
        %268 = vset.pattern.permute.xlu0 0
        %269 = vperm.xlu0 %268, %v262
        %v270 = vpop.permute.xlu0 %269
        %vm272 = vcmask 64512
        %v274 = vsel %vm272, %v261, 0
        %276 = vmatprep.subr.mxu0 %v266
        %277 = vmatpush1.msra.mxu0 %v265
        %278 = vmatprep.subr.mxu0 0.0
        %279 = vmatpush1.msra.mxu0 0.0
        %280 = vmatprep.subr.mxu0 0.0
        %281 = vmatpush1.msra.mxu0 0.0
        %282 = vmatprep.subr.mxu0 0.0
        %283 = vmatpush1.msra.mxu0 0.0
        %284 = vmatprep.subr.mxu0 0.0
        %285 = vmatpush1.msra.mxu0 0.0
        %286 = vmatprep.subr.mxu0 0.0
        %287 = vmatpush1.msra.mxu0 0.0
        %288 = vmatprep.subr.mxu0 0.0
        %289 = vmatpush1.msra.mxu0 0.0
        %290 = vmatprep.subr.mxu0 0.0
        %291 = vmatpush1.msra.mxu0 0.0
        %292 = vmatprep.subr.mxu0 0.0
        %293 = vmatpush1.msra.mxu0 0.0
        %294 = vmatprep.subr.mxu0 0.0
        %295 = vmatpush1.msra.mxu0 0.0
        %296 = vmatprep.subr.mxu0 0.0
        %297 = vmatpush1.msra.mxu0 0.0
        %298 = vmatprep.subr.mxu0 0.0
        %299 = vmatpush1.msra.mxu0 0.0
        %300 = vmatprep.subr.mxu0 0.0
        %301 = vmatpush1.msra.mxu0 0.0
        %302 = vmatprep.subr.mxu0 0.0
        %303 = vmatpush1.msra.mxu0 0.0
        %304 = vmatprep.subr.mxu0 0.0
        %305 = vmatpush1.msra.mxu0 0.0
        %306 = vmatprep.subr.mxu0 0.0
        %307 = vmatpush1.msra.mxu0 0.0
        %308 = vmatprep.subr.mxu0 0.0
        %309 = vmatpush1.msra.mxu0 0.0
        %310 = vmatprep.subr.mxu0 0.0
        %311 = vmatpush1.msra.mxu0 0.0
        %312 = vmatprep.subr.mxu0 0.0
        %313 = vmatpush1.msra.mxu0 0.0
        %314 = vmatprep.subr.mxu0 0.0
        %315 = vmatpush1.msra.mxu0 0.0
        %316 = vmatprep.subr.mxu0 0.0
        %317 = vmatpush1.msra.mxu0 0.0
        %318 = vmatprep.subr.mxu0 0.0
        %319 = vmatpush1.msra.mxu0 0.0
        %320 = vmatprep.subr.mxu0 0.0
        %321 = vmatpush1.msra.mxu0 0.0
        %322 = vmatprep.subr.mxu0 0.0
        %323 = vmatpush1.msra.mxu0 0.0
        %324 = vmatprep.subr.mxu0 0.0
        %325 = vmatpush1.msra.mxu0 0.0
        %326 = vmatprep.subr.mxu0 0.0
        %327 = vmatpush1.msra.mxu0 0.0
        %328 = vmatprep.subr.mxu0 0.0
        %329 = vmatpush1.msra.mxu0 0.0
        %330 = vmatprep.subr.mxu0 0.0
        %331 = vmatpush1.msra.mxu0 0.0
        %332 = vmatprep.subr.mxu0 0.0
        %333 = vmatpush1.msra.mxu0 0.0
        %334 = vmatprep.subr.mxu0 0.0
        %335 = vmatpush1.msra.mxu0 0.0
        %336 = vmatprep.subr.mxu0 0.0
        %337 = vmatpush1.msra.mxu0 0.0
        %338 = vmatprep.subr.mxu0 0.0
        %339 = vmatpush1.msra.mxu0 0.0
        %340 = vmatprep.mubr.f32.mxu0 0.0
        %341 = vmatmul.mubr.f32.gmra.mrb[0].mxu0 %v274
        %v342 = vpop.f32.mrb[0].mxu0
        %v343 = vadd.f32 %v270, %v342
        %v344 = vpop.f32.mrb[0].mxu0
        %v345 = vadd.f32 %v270, %v344
        %346 = vdwg.mxu0
        %v347 = vmul.f32 %v343, 0.01
        %v348 = vmul.f32 %v345, 0.01
        %v349 = vmax.f32 %v343, %v347
        %v350 = vmax.f32 %v345, %v348
        %352 = vset.pattern.permute.xlu0 0
        %353 = vperm.xlu0 %352, %v264
        %v354 = vpop.permute.xlu0 %353
        %vm356 = vcmask 31744
        %v358 = vsel %vm356, %v263, 0
        %vm360 = vcmask 1043456
        %v362 = vsel %vm360, %v349, 0
        %v365 = vsel %vm360, %v350, 0
        %367 = vmatprep.subr.mxu0 %v365
        %368 = vmatpush1.msra.mxu0 %v362
        %369 = vmatprep.subr.mxu0 0.0
        %370 = vmatpush1.msra.mxu0 0.0
        %371 = vmatprep.subr.mxu0 0.0
        %372 = vmatpush1.msra.mxu0 0.0
        %373 = vmatprep.subr.mxu0 0.0
        %374 = vmatpush1.msra.mxu0 0.0
        %375 = vmatprep.subr.mxu0 0.0
        %376 = vmatpush1.msra.mxu0 0.0
        %377 = vmatprep.subr.mxu0 0.0
        %378 = vmatpush1.msra.mxu0 0.0
        %379 = vmatprep.subr.mxu0 0.0
        %380 = vmatpush1.msra.mxu0 0.0
        %381 = vmatprep.subr.mxu0 0.0
        %382 = vmatpush1.msra.mxu0 0.0
        %383 = vmatprep.subr.mxu0 0.0
        %384 = vmatpush1.msra.mxu0 0.0
        %385 = vmatprep.subr.mxu0 0.0
        %386 = vmatpush1.msra.mxu0 0.0
        %387 = vmatprep.subr.mxu0 0.0
        %388 = vmatpush1.msra.mxu0 0.0
        %389 = vmatprep.subr.mxu0 0.0
        %390 = vmatpush1.msra.mxu0 0.0
        %391 = vmatprep.subr.mxu0 0.0
        %392 = vmatpush1.msra.mxu0 0.0
        %393 = vmatprep.subr.mxu0 0.0
        %394 = vmatpush1.msra.mxu0 0.0
        %395 = vmatprep.subr.mxu0 0.0
        %396 = vmatpush1.msra.mxu0 0.0
        %397 = vmatprep.subr.mxu0 0.0
        %398 = vmatpush1.msra.mxu0 0.0
        %399 = vmatprep.subr.mxu0 0.0
        %400 = vmatpush1.msra.mxu0 0.0
        %401 = vmatprep.subr.mxu0 0.0
        %402 = vmatpush1.msra.mxu0 0.0
        %403 = vmatprep.subr.mxu0 0.0
        %404 = vmatpush1.msra.mxu0 0.0
        %405 = vmatprep.subr.mxu0 0.0
        %406 = vmatpush1.msra.mxu0 0.0
        %407 = vmatprep.subr.mxu0 0.0
        %408 = vmatpush1.msra.mxu0 0.0
        %409 = vmatprep.subr.mxu0 0.0
        %410 = vmatpush1.msra.mxu0 0.0
        %411 = vmatprep.subr.mxu0 0.0
        %412 = vmatpush1.msra.mxu0 0.0
        %413 = vmatprep.subr.mxu0 0.0
        %414 = vmatpush1.msra.mxu0 0.0
        %415 = vmatprep.subr.mxu0 0.0
        %416 = vmatpush1.msra.mxu0 0.0
        %417 = vmatprep.subr.mxu0 0.0
        %418 = vmatpush1.msra.mxu0 0.0
        %419 = vmatprep.subr.mxu0 0.0
        %420 = vmatpush1.msra.mxu0 0.0
        %421 = vmatprep.subr.mxu0 0.0
        %422 = vmatpush1.msra.mxu0 0.0
        %423 = vmatprep.subr.mxu0 0.0
        %424 = vmatpush1.msra.mxu0 0.0
        %425 = vmatprep.subr.mxu0 0.0
        %426 = vmatpush1.msra.mxu0 0.0
        %427 = vmatprep.subr.mxu0 0.0
        %428 = vmatpush1.msra.mxu0 0.0
        %429 = vmatprep.subr.mxu0 0.0
        %430 = vmatpush1.msra.mxu0 0.0
        %431 = vmatprep.mubr.f32.mxu0 0.0
        %432 = vmatmul.mubr.f32.gmra.mrb[0].mxu0 %v358
        %v433 = vpop.f32.mrb[0].mxu0
        %v434 = vadd.f32 %v354, %v433
        %v435 = vpop.f32.mrb[0].mxu0
        %v436 = vadd.f32 %v354, %v435
        %437 = vdwg.mxu0
        %v438 = vmul.f32 %v434, 0.01
        %v439 = vmul.f32 %v436, 0.01
        %v440 = vmax.f32 %v434, %v438
        %v441 = vmax.f32 %v436, %v439
        %v442 = vsub.f32 0.0, %v440
        %v443 = vsub.f32 0.0, %v441
        %v444 = vmul.f32 %v442, 1.442695
        %v445 = vpow.pop %v444
        %v446 = vmul.f32 %v443, 1.442695
        %v447 = vpow.pop %v446
        %v448 = vadd.f32 %v445, 1.0
        %v449 = vadd.f32 %v447, 1.0
        %v450 = vrcp.pop %v448
        %v451 = vrcp.pop %v449
        %v454 = vcombine.low %v450, %v451
        %456 = vst [vmem:[%s258] sm:$0xff] %v454
        %s457 = sand.u32 %s156, 1
        %s458 = scalar_lea.sflag [#allocation4], %s457
        %s459 = sand.u32 %s156, 1
        %s460 = smul.addr %s459, 8
        %s461 = scalar_lea.vmem [#allocation5], %s460
        // Predicated region
        $region45: #{tpu_custom_call.1} parent=39 // pred_check
          %p462 = pneg %p166
        $region46: #{tpu_custom_call.1} parent=39 // pred_check_branch
          %464 = sbr.rel (%p462) target = $region48
        $region47: #{tpu_custom_call.1} parent=39 // pred_region
          %s465 = smul.u32 2, %s27
          %s467 = ssub.s32 128, 128
          %468 = vsyncadd %s458, %s467
          %s469 = smul.addr %s26, 2
          %s470 = sadd.s32 %s465, %s469
          %s471 = smul.addr %s470, 64
          %s472 = scalar_lea.hbm %s5, %s471
          %s474 = sshll.u32 %s461, 4
          %s475 = int_to_ptr.vmem [resolvable:$true] %s474
          %477 = dma.vmem_to_hbm [thread:$0]  %s475, 128, %s472, %s458
        $region48: #{tpu_custom_call.1} parent=39 // pred_fallthru
          _
      $region40: #{tpu_custom_call.1} parent=5 // pred_fallthru
        _
      %p478 = scmp.le.s32.totalorder 2, %s17
      // Predicated region
      $region49: #{tpu_custom_call.1} parent=5 // pred_check
        %p479 = pneg %p478
      $region50: #{tpu_custom_call.1} parent=5 // pred_check_branch
        %481 = sbr.rel (%p479) target = $region52
      $region51: #{tpu_custom_call.1} parent=5 // pred_region
        %s482 = ssub.s32 %s17, 2
        // Predicated region
        $region53: #{tpu_custom_call.1} parent=51 // pred_check
          %p483 = pneg %p172
        $region54: #{tpu_custom_call.1} parent=51 // pred_check_branch
          %485 = sbr.rel (%p483) target = $region56
        $region55: #{tpu_custom_call.1} parent=51 // pred_region
          %s486 = sand.u32 %s157, 1
          %s487 = scalar_lea.sflag [#allocation4], %s486
          %s488 = sand.u32 %s157, 1
          %s489 = smul.addr %s488, 8
          %s490 = scalar_lea.vmem [#allocation5], %s489
          %491 = dma.done %s487, 128
        $region56: #{tpu_custom_call.1} parent=51 // pred_fallthru
          _
      $region52: #{tpu_custom_call.1} parent=5 // pred_fallthru
        _
    $region6: #{tpu_custom_call.1} parent=1 // loop_footer
      %s21 = sadd.s32 1, %s17
    $region7: #{tpu_custom_call.1} parent=1 // loop_footer_branch
      %16 = sbr.rel target = $region3
    $region8: #{tpu_custom_call.1} parent=1 // loop_exit
      _
    %492 = vsyncpa [#allocation3], 1
    %s493 = scalar_lea.sflag [#allocation3], 1
    %494 = vsyncpa %s493, 1
    %495 = vsyncpa [#allocation4], 1
    %s496 = scalar_lea.sflag [#allocation4], 1
    %497 = vsyncpa %s496, 1

</llo_original>
